<compile_context>
chip_gen: v5e
topology: v5e:2x2
jax: 0.10.0
libtpu: 0.0.40
codegen_flags: <defaults>
</compile_context>

<pallas_src>
import jax
import jax.numpy as jnp
from jax.experimental import pallas as pl
from jax.experimental.pallas import tpu as pltpu


def pe_kernel(coef_ref, xf_ref, yf_ref, w_ref, o_ref):
    # coef_ref: SMEM (8,) f32 = [A, B, 2C, 2D, 2E, F, 0, 0]
    # xf_ref / yf_ref: (1, TN) lane-dense frequency rows
    # w_ref: (d_model, 3) packed columns [wx | wy | b]
    # o_ref: (d_model, TN)
    xf = xf_ref[...]
    yf = yf_ref[...]
    wx = w_ref[:, 0:1]
    wy = w_ref[:, 1:2]
    bb = w_ref[:, 2:3]

    # Linear(2 -> d_model) as two broadcast FMAs on the VPU (no MXU).
    y = wx * xf + wy * yf + bb                              # (D, TN)

    # ||y||^2 over the d_model axis in closed form (no cross-sublane reduce).
    ss = (coef_ref[0] * (xf * xf)
          + coef_ref[1] * (yf * yf)
          + coef_ref[2] * (xf * yf)
          + coef_ref[3] * xf
          + coef_ref[4] * yf
          + coef_ref[5])                                    # (1, TN)

    # F.normalize: x / max(||x||, 1e-12)  ==  x * rsqrt(max(||x||^2, 1e-24))
    inv = jax.lax.rsqrt(jnp.maximum(ss, 1e-24))             # EUP rsqrt
    o_ref[...] = y * inv


def _choose_tile(n, d_model):
    """Lane-tile size: ~3 MiB output block, multiple of 128, >=2 tiles if possible."""
    n128 = ((n + 127) // 128) * 128
    # ~3 MiB output block target (double-buffered -> ~6 MiB, safe on v5e/v6e/v7x
    # default scoped VMEM).
    target = max(128, ((3 << 20) // (d_model * 4)) // 128 * 128)
    # Keep at least 2 tiles so the parallel axis can shard across v7x's two TCs.
    if n128 >= 256:
        half = (((n128 // 2) + 127) // 128) * 128
        target = min(target, half)
    return max(128, min(target, n128))


def positional_encoding(image, weight, bias):
    """weight: (d_model, 2) [PyTorch nn.Linear layout], bias: (d_model,)."""
    b, c, h, w = image.shape
    wh = w // 2 + 1
    d_model = weight.shape[0]
    n = h * wh

    # Frequency values per flattened index (n = ix*wh + iy), lane-dense rows.
    xf = jnp.fft.fftfreq(h).astype(jnp.float32)      # (h,)
    yf = jnp.fft.rfftfreq(w).astype(jnp.float32)     # (wh,)
    xg = jnp.repeat(xf, wh)                          # (n,)  == xfreqgrid.flatten()
    yg = jnp.tile(yf, h)                             # (n,)  == yfreqgrid.flatten()

    tn = _choose_tile(n, d_model)
    n_tiles = pl.cdiv(n, tn)
    n_pad = n_tiles * tn
    pad = n_pad - n
    xg = jnp.pad(xg, (0, pad)).reshape(1, n_pad)
    yg = jnp.pad(yg, (0, pad)).reshape(1, n_pad)

    wx = weight[:, 0].astype(jnp.float32)
    wy = weight[:, 1].astype(jnp.float32)
    bb = bias.astype(jnp.float32)

    # Packed weights: one small resident VMEM input instead of three.
    w_packed = jnp.stack([wx, wy, bb], axis=1)       # (d_model, 3)

    # Closed-form sum-of-squares coefficients (SMEM scalars).
    coef = jnp.stack([
        jnp.sum(wx * wx),           # A
        jnp.sum(wy * wy),           # B
        2.0 * jnp.sum(wx * wy),     # 2C
        2.0 * jnp.sum(wx * bb),     # 2D
        2.0 * jnp.sum(wy * bb),     # 2E
        jnp.sum(bb * bb),           # F
        jnp.float32(0.0),
        jnp.float32(0.0),
    ]).astype(jnp.float32)                           # (8,)

    out = pl.pallas_call(
        pe_kernel,
        out_shape=jax.ShapeDtypeStruct((d_model, n_pad), jnp.float32),
        grid=(n_tiles,),
        in_specs=[
            pl.BlockSpec(memory_space=pltpu.MemorySpace.SMEM),      # coef
            pl.BlockSpec((1, tn), lambda i: (0, i)),                # xf row
            pl.BlockSpec((1, tn), lambda i: (0, i)),                # yf row
            pl.BlockSpec((d_model, 3), lambda i: (0, 0)),           # packed weights
        ],
        out_specs=pl.BlockSpec((d_model, tn), lambda i: (0, i)),
        compiler_params=pltpu.CompilerParams(
            dimension_semantics=("parallel",)
        ),
    )(coef, xg, yg, w_packed)

    # (d, n_pad) -> (d, h, wh): layout already channel-major, no transpose needed.
    out = out[:, :n].reshape(d_model, h, wh)
    # Batch broadcast + complex cast to match the PyTorch output contract.
    # TODO(synk): this XLA epilogue dominates HBM traffic; skip if the consumer
    # accepts the unbatched real (d, h, wh) tensor.
    out = jnp.broadcast_to(out[None], (b, d_model, h, wh))
    return out.astype(jnp.complex64)


def _reference(image, weight, bias):
    """Plain-JAX reference mirroring the PyTorch module."""
    b, c, h, w = image.shape
    wh = w // 2 + 1
    d_model = weight.shape[0]
    xf = jnp.fft.fftfreq(h).astype(jnp.float32)
    yf = jnp.fft.rfftfreq(w).astype(jnp.float32)
    xg, yg = jnp.meshgrid(xf, yf, indexing="ij")
    freq = jnp.stack([xg, yg], axis=-1)                     # (h, wh, 2)
    y = freq @ weight.T.astype(jnp.float32) + bias.astype(jnp.float32)
    norm = jnp.maximum(jnp.sqrt(jnp.sum(y * y, axis=-1, keepdims=True)), 1e-12)
    y = y / norm                                            # (h, wh, d)
    y = jnp.transpose(y, (2, 0, 1))                         # (d, h, wh)
    return jnp.broadcast_to(y[None], (b, d_model, h, wh)).astype(jnp.complex64)


if __name__ == "__main__":
    key = jax.random.PRNGKey(0)
    k_img, k_w, k_b = jax.random.split(key, 3)

    b, c, h, w = 2, 4, 16, 16
    d_model = 32

    image = jax.random.normal(k_img, (b, c, h, w), dtype=jnp.float32)
    # Deterministic synthetic params for nn.Linear(2, d_model)
    weight = jax.random.normal(k_w, (d_model, 2), dtype=jnp.float32) * 0.5
    bias = jax.random.normal(k_b, (d_model,), dtype=jnp.float32) * 0.1

    out = positional_encoding(image, weight, bias)
    out = jax.block_until_ready(out)

    assert out.shape == (b, d_model, h, w // 2 + 1), out.shape
    assert out.dtype == jnp.complex64, out.dtype
    assert bool(jnp.all(jnp.isfinite(out.real)))

    ref = jax.block_until_ready(_reference(image, weight, bias))
    assert bool(jnp.allclose(out.real, ref.real, atol=1e-5, rtol=1e-5))
    assert bool(jnp.all(out.imag == 0.0))

    print("KERNEL_OK")
</pallas_src>

<mosaic_0001>
module attributes {stable_mosaic.version = 11 : i64} {
  func.func @pe_kernel(%arg0: i32, %arg1: memref<8xf32, #tpu.memory_space<smem>>, %arg2: memref<1x128xf32, #tpu.memory_space<vmem>>, %arg3: memref<1x128xf32, #tpu.memory_space<vmem>>, %arg4: memref<32x3xf32, #tpu.memory_space<vmem>>, %arg5: memref<32x128xf32, #tpu.memory_space<vmem>>) attributes {dimension_semantics = [#tpu.dimension_semantics<parallel>], iteration_bounds = array<i64: 2>, scalar_prefetch = 0 : i64, scratch_operands = 0 : i64, tpu.core_type = #tpu.core_type<tc>, window_params = [{transform_indices = @transform_0, window_bounds = array<i64: 8>}, {transform_indices = @transform_1, window_bounds = array<i64: 1, 128>}, {transform_indices = @transform_2, window_bounds = array<i64: 1, 128>}, {pipeline_mode = #tpu.pipeline_mode<synchronous>, transform_indices = @transform_3, window_bounds = array<i64: 32, 3>}, {transform_indices = @transform_4, window_bounds = array<i64: 32, 128>}]} {
    %c0 = arith.constant 0 : index
    %c0_0 = arith.constant 0 : index
    %0 = vector.load %arg2[%c0, %c0_0] : memref<1x128xf32, #tpu.memory_space<vmem>>, vector<1x128xf32>
    %c0_1 = arith.constant 0 : index
    %c0_2 = arith.constant 0 : index
    %1 = vector.load %arg3[%c0_1, %c0_2] : memref<1x128xf32, #tpu.memory_space<vmem>>, vector<1x128xf32>
    %c0_3 = arith.constant 0 : index
    %c0_4 = arith.constant 0 : index
    %2 = vector.load %arg4[%c0_3, %c0_4] : memref<32x3xf32, #tpu.memory_space<vmem>>, vector<32x1xf32>
    %c0_5 = arith.constant 0 : index
    %c1 = arith.constant 1 : index
    %3 = vector.load %arg4[%c0_5, %c1] : memref<32x3xf32, #tpu.memory_space<vmem>>, vector<32x1xf32>
    %c0_6 = arith.constant 0 : index
    %c2 = arith.constant 2 : index
    %4 = vector.load %arg4[%c0_6, %c2] : memref<32x3xf32, #tpu.memory_space<vmem>>, vector<32x1xf32>
    %5 = vector.broadcast %2 : vector<32x1xf32> to vector<32x128xf32>
    %6 = vector.broadcast %0 : vector<1x128xf32> to vector<32x128xf32>
    %7 = arith.mulf %5, %6 : vector<32x128xf32>
    %8 = vector.broadcast %3 : vector<32x1xf32> to vector<32x128xf32>
    %9 = vector.broadcast %1 : vector<1x128xf32> to vector<32x128xf32>
    %10 = arith.mulf %8, %9 : vector<32x128xf32>
    %11 = arith.addf %7, %10 : vector<32x128xf32>
    %12 = vector.broadcast %4 : vector<32x1xf32> to vector<32x128xf32>
    %13 = arith.addf %11, %12 : vector<32x128xf32>
    %c0_7 = arith.constant 0 : index
    %14 = memref.load %arg1[%c0_7] : memref<8xf32, #tpu.memory_space<smem>>
    %15 = arith.mulf %0, %0 : vector<1x128xf32>
    %16 = vector.broadcast %14 : f32 to vector<1x128xf32>
    %17 = arith.mulf %16, %15 : vector<1x128xf32>
    %c1_8 = arith.constant 1 : index
    %18 = memref.load %arg1[%c1_8] : memref<8xf32, #tpu.memory_space<smem>>
    %19 = arith.mulf %1, %1 : vector<1x128xf32>
    %20 = vector.broadcast %18 : f32 to vector<1x128xf32>
    %21 = arith.mulf %20, %19 : vector<1x128xf32>
    %22 = arith.addf %17, %21 : vector<1x128xf32>
    %c2_9 = arith.constant 2 : index
    %23 = memref.load %arg1[%c2_9] : memref<8xf32, #tpu.memory_space<smem>>
    %24 = arith.mulf %0, %1 : vector<1x128xf32>
    %25 = vector.broadcast %23 : f32 to vector<1x128xf32>
    %26 = arith.mulf %25, %24 : vector<1x128xf32>
    %27 = arith.addf %22, %26 : vector<1x128xf32>
    %c3 = arith.constant 3 : index
    %28 = memref.load %arg1[%c3] : memref<8xf32, #tpu.memory_space<smem>>
    %29 = vector.broadcast %28 : f32 to vector<1x128xf32>
    %30 = arith.mulf %29, %0 : vector<1x128xf32>
    %31 = arith.addf %27, %30 : vector<1x128xf32>
    %c4 = arith.constant 4 : index
    %32 = memref.load %arg1[%c4] : memref<8xf32, #tpu.memory_space<smem>>
    %33 = vector.broadcast %32 : f32 to vector<1x128xf32>
    %34 = arith.mulf %33, %1 : vector<1x128xf32>
    %35 = arith.addf %31, %34 : vector<1x128xf32>
    %c5 = arith.constant 5 : index
    %36 = memref.load %arg1[%c5] : memref<8xf32, #tpu.memory_space<smem>>
    %37 = vector.broadcast %36 : f32 to vector<1x128xf32>
    %38 = arith.addf %35, %37 : vector<1x128xf32>
    %cst = arith.constant 1.000000e-24 : f32
    %39 = vector.broadcast %cst : f32 to vector<1x128xf32>
    %40 = arith.maximumf %38, %39 : vector<1x128xf32>
    %41 = math.rsqrt %40 : vector<1x128xf32>
    %42 = vector.broadcast %41 : vector<1x128xf32> to vector<32x128xf32>
    %43 = arith.mulf %13, %42 : vector<32x128xf32>
    %c0_10 = arith.constant 0 : index
    %c0_11 = arith.constant 0 : index
    %44 = vector.load %arg5[%c0_10, %c0_11] : memref<32x128xf32, #tpu.memory_space<vmem>>, vector<32x128xf32>
    tpu.vector_store %arg5[%c0_10, %c0_11], %43 {strides = array<i32>} : memref<32x128xf32, #tpu.memory_space<vmem>>, vector<32x128xf32>,
    return
  }
  func.func @transform_0(%arg0: i32) -> i32 {
    %c0_i32 = arith.constant 0 : i32
    %c0_i32_0 = arith.constant 0 : i32
    return %c0_i32 : i32
  }
  func.func @transform_1(%arg0: i32) -> (i32, i32) {
    %c0_i32 = arith.constant 0 : i32
    %c0_i32_0 = arith.constant 0 : i32
    return %c0_i32, %arg0 : i32, i32
  }
  func.func @transform_2(%arg0: i32) -> (i32, i32) {
    %c0_i32 = arith.constant 0 : i32
    %c0_i32_0 = arith.constant 0 : i32
    return %c0_i32, %arg0 : i32, i32
  }
  func.func @transform_3(%arg0: i32) -> (i32, i32) {
    %c0_i32 = arith.constant 0 : i32
    %c0_i32_0 = arith.constant 0 : i32
    %c0_i32_1 = arith.constant 0 : i32
    return %c0_i32, %c0_i32_0 : i32, i32
  }
  func.func @transform_4(%arg0: i32) -> (i32, i32) {
    %c0_i32 = arith.constant 0 : i32
    %c0_i32_0 = arith.constant 0 : i32
    return %c0_i32, %arg0 : i32, i32
  }
}

</mosaic_0001>

<llo_original>
// kernel: tpu_custom_call.1
$region0: #{tpu_custom_call.1}
  #allocation0 [shape = 'u32[]', space=smem, size = 0x4, offset = 0x4, fixed_abs, tag = 'smem constant byte address 0x4 - core index']
  #allocation1 [shape = 'u32[72,128]{1,0:T(1,128)}', space=vmem, size = 0x9000, scoped, tag = 'internal scratch']
  %s0 = inlined_call_operand.vmem [shape: f32[8], index: 0, kind: input, shape index: {}]
  %s1 = inlined_call_operand.vmem [shape: f32[1,256], index: 1, kind: input, shape index: {}]
  %s2 = inlined_call_operand.vmem [shape: f32[1,256], index: 2, kind: input, shape index: {}]
  %s3 = inlined_call_operand.vmem [shape: f32[32,3], index: 3, kind: input, shape index: {}]
  %s4 = inlined_call_operand.hbm [shape: f32[32,256], index: 4, kind: output, shape index: {}]
  %s5 = sld [smem:[#allocation0]]
  $region53: #{tpu_custom_call.1} parent=0
    _
  %s7 = ssub.s32 1, %s5
  %s8 = scalar_select 0, %s7, %s5
  $region1: #{tpu_custom_call.1} parent=0
    #allocation2 [shape = 'u8[512]{0}', space=smem, size = 0x200, scoped, tag = 'input window, operand 0, single buffered']
    #allocation3 [shape = 's32[2]{0}', space=sflag, size = 0x8, scoped, tag = 'scoped memory for tpu_custom_call.1']
    #allocation4 [shape = 's32[2]{0}', space=sflag, size = 0x8, scoped, tag = 'scoped memory for tpu_custom_call.1']
    #allocation5 [shape = 'u8[32768]{0}', space=vmem, size = 0x8000, scoped, tag = 'output window, operand 0']
    %9 = vsyncpa [#allocation4], 0
    %10 = vsyncpa [#allocation3], 0
    %s11 = scalar_lea.sflag [#allocation3], 1
    %12 = vsyncpa %s11, 0
    loop: start=0, step=1, limit=4
    $region2: #{tpu_custom_call.1} parent=1 // loop_pre_header
      _
    $region3: #{tpu_custom_call.1} parent=1 // loop_header
      %s14 = sphi 0, %s18
      %p15 = scmp.ge.s32.totalorder %s14, 4
      %s22 = sphi 0, %s22
      %s24 = sphi 0, %s22
      %s25 = sphi 0, %s24
      %s39 = sphi 0, %s25
      %s45 = sphi 0, %s47
      %s48 = sphi 0, %s45
      %s49 = sphi 0, %s48
      %s65 = sphi 0, %s49
      %s71 = sphi 0, %s73
      %s74 = sphi 0, %s71
      %s75 = sphi 0, %s74
      %s91 = sphi 0, %s75
      %s95 = sphi 0, %s95
      %s97 = sphi 0, %s95
      %s98 = sphi 0, %s97
      %s112 = sphi 0, %s98
      %s118 = sphi 0, %s120
      %s121 = sphi 0, %s118
      %s122 = sphi 0, %s121
      %s138 = sphi 0, %s122
    $region4: #{tpu_custom_call.1} parent=1 // loop_header_branch
      %17 = sbr.rel (%p15) target = $region8
    $region5: #{tpu_custom_call.1} parent=1 // loop_body
      %s19 = ssub.s32 %s14, 1
      %s20 = ssub.s32 %s14, 2
      %s21 = sadd.s32 %s14, 1
      %s23 = sadd.s32 %s22, 1
      %p26 = scmp.eq.s32.totalorder %s14, 1
      %p27 = scmp.ne.s32.totalorder %s22, %s24
      %p28 = scmp.eq.s32.totalorder %s14, 0
      %p29 = por %p27, %p28
      %p30 = scmp.ne.s32.totalorder %s22, %s24
      %p31 = scmp.eq.s32.totalorder %s19, 1
      %p32 = por %p30, %p31
      %p33 = scmp.ne.s32.totalorder %s24, %s25
      %p34 = scmp.eq.s32.totalorder %s19, 0
      %p35 = por %p33, %p34
      %p36 = scmp.ne.s32.totalorder %s24, %s25
      %p37 = scmp.eq.s32.totalorder %s20, 1
      %p38 = por %p36, %p37
      %p40 = scmp.ne.s32.totalorder %s25, %s39
      %p41 = scmp.eq.s32.totalorder %s20, 0
      %p42 = por %p40, %p41
      %s43 = ssub.s32 %s14, %s21
      %p44 = scmp.eq.s32.totalorder %s43, 0
      %s46 = sadd.s32 %s45, 1
      %s47 = scalar_select %p44, %s45, %s46
      %p50 = pneg %p44
      %p51 = scmp.eq.s32.totalorder %s14, 1
      %p52 = por %p50, %p51
      %p53 = scmp.ne.s32.totalorder %s45, %s48
      %p54 = scmp.eq.s32.totalorder %s14, 0
      %p55 = por %p53, %p54
      %p56 = scmp.ne.s32.totalorder %s45, %s48
      %p57 = scmp.eq.s32.totalorder %s19, 1
      %p58 = por %p56, %p57
      %p59 = scmp.ne.s32.totalorder %s48, %s49
      %p60 = scmp.eq.s32.totalorder %s19, 0
      %p61 = por %p59, %p60
      %p62 = scmp.ne.s32.totalorder %s48, %s49
      %p63 = scmp.eq.s32.totalorder %s20, 1
      %p64 = por %p62, %p63
      %p66 = scmp.ne.s32.totalorder %s49, %s65
      %p67 = scmp.eq.s32.totalorder %s20, 0
      %p68 = por %p66, %p67
      %s69 = ssub.s32 %s14, %s21
      %p70 = scmp.eq.s32.totalorder %s69, 0
      %s72 = sadd.s32 %s71, 1
      %s73 = scalar_select %p70, %s71, %s72
      %p76 = pneg %p70
      %p77 = scmp.eq.s32.totalorder %s14, 1
      %p78 = por %p76, %p77
      %p79 = scmp.ne.s32.totalorder %s71, %s74
      %p80 = scmp.eq.s32.totalorder %s14, 0
      %p81 = por %p79, %p80
      %p82 = scmp.ne.s32.totalorder %s71, %s74
      %p83 = scmp.eq.s32.totalorder %s19, 1
      %p84 = por %p82, %p83
      %p85 = scmp.ne.s32.totalorder %s74, %s75
      %p86 = scmp.eq.s32.totalorder %s19, 0
      %p87 = por %p85, %p86
      %p88 = scmp.ne.s32.totalorder %s74, %s75
      %p89 = scmp.eq.s32.totalorder %s20, 1
      %p90 = por %p88, %p89
      %p92 = scmp.ne.s32.totalorder %s75, %s91
      %p93 = scmp.eq.s32.totalorder %s20, 0
      %p94 = por %p92, %p93
      %s96 = sadd.s32 %s95, 1
      %p99 = scmp.eq.s32.totalorder %s14, 1
      %p100 = scmp.ne.s32.totalorder %s95, %s97
      %p101 = scmp.eq.s32.totalorder %s14, 0
      %p102 = por %p100, %p101
      %p103 = scmp.ne.s32.totalorder %s95, %s97
      %p104 = scmp.eq.s32.totalorder %s19, 1
      %p105 = por %p103, %p104
      %p106 = scmp.ne.s32.totalorder %s97, %s98
      %p107 = scmp.eq.s32.totalorder %s19, 0
      %p108 = por %p106, %p107
      %p109 = scmp.ne.s32.totalorder %s97, %s98
      %p110 = scmp.eq.s32.totalorder %s20, 1
      %p111 = por %p109, %p110
      %p113 = scmp.ne.s32.totalorder %s98, %s112
      %p114 = scmp.eq.s32.totalorder %s20, 0
      %p115 = por %p113, %p114
      %s116 = ssub.s32 %s14, %s21
      %p117 = scmp.eq.s32.totalorder %s116, 0
      %s119 = sadd.s32 %s118, 1
      %s120 = scalar_select %p117, %s118, %s119
      %p123 = pneg %p117
      %p124 = scmp.eq.s32.totalorder %s14, 1
      %p125 = por %p123, %p124
      %p126 = scmp.ne.s32.totalorder %s118, %s121
      %p127 = scmp.eq.s32.totalorder %s14, 0
      %p128 = por %p126, %p127
      %p129 = scmp.ne.s32.totalorder %s118, %s121
      %p130 = scmp.eq.s32.totalorder %s19, 1
      %p131 = por %p129, %p130
      %p132 = scmp.ne.s32.totalorder %s121, %s122
      %p133 = scmp.eq.s32.totalorder %s19, 0
      %p134 = por %p132, %p133
      %p135 = scmp.ne.s32.totalorder %s121, %s122
      %p136 = scmp.eq.s32.totalorder %s20, 1
      %p137 = por %p135, %p136
      %p139 = scmp.ne.s32.totalorder %s122, %s138
      %p140 = scmp.eq.s32.totalorder %s20, 0
      %p141 = por %p139, %p140
      %p142 = scmp.le.s32.totalorder 1, %s14
      %p143 = scmp.lt.s32.totalorder %s14, 3
      %p144 = pnand %p142, %p143
      %p145 = pneg %p144
      // Predicated region
      $region9: #{tpu_custom_call.1} parent=5 // pred_check
        _
      $region10: #{tpu_custom_call.1} parent=5 // pred_check_branch
        %147 = sbr.rel (%p144) target = $region12
      $region11: #{tpu_custom_call.1} parent=5 // pred_region
        %s148 = ssub.s32 %s14, 1
        // Predicated region
        $region13: #{tpu_custom_call.1} parent=11 // pred_check
          %p149 = pneg %p35
        $region14: #{tpu_custom_call.1} parent=11 // pred_check_branch
          %151 = sbr.rel (%p149) target = $region16
        $region15: #{tpu_custom_call.1} parent=11 // pred_region
          %153 = vsyncadd [#allocation4], 0
          %s155 = sshll.u32 %s0, 4
          %s156 = int_to_ptr.vmem [resolvable:$true] %s155
          %158 = dma.vmem_to_smem %s156, 16, [#allocation2], [#allocation4]
        $region16: #{tpu_custom_call.1} parent=11 // pred_fallthru
          _
        // Predicated region
        $region17: #{tpu_custom_call.1} parent=11 // pred_check
          %p159 = pneg %p108
        $region18: #{tpu_custom_call.1} parent=11 // pred_check_branch
          %161 = sbr.rel (%p159) target = $region20
        $region19: #{tpu_custom_call.1} parent=11 // pred_region
          _
        $region20: #{tpu_custom_call.1} parent=11 // pred_fallthru
          _
      $region12: #{tpu_custom_call.1} parent=5 // pred_fallthru
        _
      %p162 = scmp.lt.s32.totalorder %s14, 2
      // Predicated region
      $region21: #{tpu_custom_call.1} parent=5 // pred_check
        %p163 = pneg %p162
      $region22: #{tpu_custom_call.1} parent=5 // pred_check_branch
        %165 = sbr.rel (%p163) target = $region24
      $region23: #{tpu_custom_call.1} parent=5 // pred_region
        // Predicated region
        $region25: #{tpu_custom_call.1} parent=23 // pred_check
          %p166 = pneg %p55
        $region26: #{tpu_custom_call.1} parent=23 // pred_check_branch
          %168 = sbr.rel (%p166) target = $region28
        $region27: #{tpu_custom_call.1} parent=23 // pred_region
          %p169 = scmp.lt.s32.totalorder %s14, 1
          %s170 = scalar_select %p169, %s14, 1
          %s171 = scalar_lea.vmem %s1, %s170
        $region28: #{tpu_custom_call.1} parent=23 // pred_fallthru
          _
        // Predicated region
        $region29: #{tpu_custom_call.1} parent=23 // pred_check
          %p172 = pneg %p81
        $region30: #{tpu_custom_call.1} parent=23 // pred_check_branch
          %174 = sbr.rel (%p172) target = $region32
        $region31: #{tpu_custom_call.1} parent=23 // pred_region
          %p175 = scmp.lt.s32.totalorder %s14, 1
          %s176 = scalar_select %p175, %s14, 1
          %s177 = scalar_lea.vmem %s2, %s176
        $region32: #{tpu_custom_call.1} parent=23 // pred_fallthru
          _
      $region24: #{tpu_custom_call.1} parent=5 // pred_fallthru
        _
      %p178 = scmp.le.s32.totalorder 1, %s14
      %p179 = scmp.lt.s32.totalorder %s14, 3
      %p180 = pnand %p178, %p179
      %p181 = pneg %p180
      // Predicated region
      $region33: #{tpu_custom_call.1} parent=5 // pred_check
        _
      $region34: #{tpu_custom_call.1} parent=5 // pred_check_branch
        %183 = sbr.rel (%p180) target = $region36
      $region35: #{tpu_custom_call.1} parent=5 // pred_region
        %s184 = ssub.s32 %s14, 1
        // Predicated region
        $region37: #{tpu_custom_call.1} parent=35 // pred_check
          %p185 = pneg %p35
        $region38: #{tpu_custom_call.1} parent=35 // pred_check_branch
          %187 = sbr.rel (%p185) target = $region40
        $region39: #{tpu_custom_call.1} parent=35 // pred_region
          %189 = dma.done [#allocation4], 16
        $region40: #{tpu_custom_call.1} parent=35 // pred_fallthru
          _
        %190 = sfence
        %p191 = pneg %p35
        %p192 = pneg %p32
        %p193 = scmp.lt.s32.totalorder %s19, 1
        %s194 = scalar_select %p193, %s19, 1
        %s195 = scalar_lea.vmem %s1, %s194
        %p196 = pneg %p61
        %p197 = pneg %p58
        %p198 = scmp.lt.s32.totalorder %s19, 1
        %s199 = scalar_select %p198, %s19, 1
        %s200 = scalar_lea.vmem %s2, %s199
        %p201 = pneg %p87
        %p202 = pneg %p84
        %p203 = pneg %p108
        %p204 = pneg %p105
        %p205 = pneg %p134
        %p206 = pneg %p131
        %s207 = sand.u32 %s121, 1
        %s208 = scalar_lea.sflag [#allocation3], %s207
        %s209 = sand.u32 %s121, 1
        %s210 = smul.addr %s209, 32
        %s211 = scalar_lea.vmem [#allocation5], %s210
        %p212 = scmp.lt.s32.totalorder %s19, 1
        %s213 = scalar_select %p212, %s19, 1
        %s214 = scalar_lea.vmem %s1, %s213
        %p215 = scmp.lt.s32.totalorder %s19, 1
        %s216 = scalar_select %p215, %s19, 1
        %s217 = scalar_lea.vmem %s2, %s216
        %v218 = vld [vmem:[%s214] sm:$0x1]
        %v219 = vld [vmem:[%s217] sm:$0x1]
        %v220 = vld [vmem:[%s3] sm:$0xff]
        %v221 = vld [vmem:[%s3 + $0x8] sm:$0xff]
        %v222 = vld [vmem:[%s3 + $0x10] sm:$0xff]
        %v223 = vld [vmem:[%s3 + $0x18] sm:$0xff]
        %225 = vset.pattern.permute.xlu0 0
        %226 = vperm.xlu0 %225, %v220
        %v227 = vpop.permute.xlu0 %226
        %230 = vset.pattern.permute.xlu0 0
        %231 = vperm.xlu0 %230, %v221
        %v232 = vpop.permute.xlu0 %231
        %235 = vset.pattern.permute.xlu0 0
        %236 = vperm.xlu0 %235, %v222
        %v237 = vpop.permute.xlu0 %236
        %240 = vset.pattern.permute.xlu0 0
        %241 = vperm.xlu0 %240, %v223
        %v242 = vpop.permute.xlu0 %241
        %v245 = vperm.slane %v218, 0
        %v247 = vmul.f32 %v227, %v245
        %v248 = vmul.f32 %v232, %v245
        %v249 = vmul.f32 %v237, %v245
        %v250 = vmul.f32 %v242, %v245
        %251 = vset.pattern.permute.xlu0 1
        %252 = vperm.xlu0 %251, %v220
        %v253 = vpop.permute.xlu0 %252
        %255 = vset.pattern.permute.xlu0 1
        %256 = vperm.xlu0 %255, %v221
        %v257 = vpop.permute.xlu0 %256
        %259 = vset.pattern.permute.xlu0 1
        %260 = vperm.xlu0 %259, %v222
        %v261 = vpop.permute.xlu0 %260
        %263 = vset.pattern.permute.xlu0 1
        %264 = vperm.xlu0 %263, %v223
        %v265 = vpop.permute.xlu0 %264
        %v268 = vperm.slane %v219, 0
        %v270 = vmul.f32 %v253, %v268
        %v271 = vmul.f32 %v257, %v268
        %v272 = vmul.f32 %v261, %v268
        %v273 = vmul.f32 %v265, %v268
        %v274 = vadd.f32 %v247, %v270
        %v275 = vadd.f32 %v248, %v271
        %v276 = vadd.f32 %v249, %v272
        %v277 = vadd.f32 %v250, %v273
        %278 = vset.pattern.permute.xlu0 2
        %279 = vperm.xlu0 %278, %v220
        %v280 = vpop.permute.xlu0 %279
        %282 = vset.pattern.permute.xlu0 2
        %283 = vperm.xlu0 %282, %v221
        %v284 = vpop.permute.xlu0 %283
        %286 = vset.pattern.permute.xlu0 2
        %287 = vperm.xlu0 %286, %v222
        %v288 = vpop.permute.xlu0 %287
        %290 = vset.pattern.permute.xlu0 2
        %291 = vperm.xlu0 %290, %v223
        %v292 = vpop.permute.xlu0 %291
        %v294 = vadd.f32 %v274, %v280
        %v295 = vadd.f32 %v275, %v284
        %v296 = vadd.f32 %v276, %v288
        %v297 = vadd.f32 %v277, %v292
        %s298 = sld [smem:[#allocation2]]
        %v299 = vmul.f32 %v218, %v218
        %v300 = vstv %s298
        %v301 = vmul.f32 %v300, %v299
        %s302 = sld [smem:[#allocation2 + $0x1]]
        %v303 = vmul.f32 %v219, %v219
        %v304 = vstv %s302
        %v305 = vmul.f32 %v304, %v303
        %v306 = vadd.f32 %v301, %v305
        %s307 = sld [smem:[#allocation2 + $0x2]]
        %v308 = vmul.f32 %v218, %v219
        %v309 = vstv %s307
        %v310 = vmul.f32 %v309, %v308
        %v311 = vadd.f32 %v306, %v310
        %s312 = sld [smem:[#allocation2 + $0x3]]
        %v313 = vstv %s312
        %v314 = vmul.f32 %v313, %v218
        %v315 = vadd.f32 %v311, %v314
        %s316 = sld [smem:[#allocation2 + $0x4]]
        %v317 = vstv %s316
        %v318 = vmul.f32 %v317, %v219
        %v319 = vadd.f32 %v315, %v318
        %s320 = sld [smem:[#allocation2 + $0x5]]
        %v321 = vstv %s320
        %v322 = vadd.f32 %v319, %v321
        %v323 = vmax.f32 %v322, 1e-24
        %v324 = vrsqrt.pop %v323
        %v325 = vmul.f32 %v324, %v323
        %v326 = vmul.f32 %v325, %v324
        %v327 = vmul.f32 0.5, %v326
        %v328 = vsub.f32 1.5, %v327
        %v329 = vmul.f32 %v324, %v328
        %vm330 = vweird.f32 %v323
        %vm331 = vweird.f32 %v324
        %vm332 = vmor %vm330, %vm331
        %v333 = vsel %vm332, %v324, %v329
        %v335 = vperm.slane %v333, 0
        %v337 = vmul.f32 %v294, %v335
        %v338 = vmul.f32 %v295, %v335
        %v339 = vmul.f32 %v296, %v335
        %v340 = vmul.f32 %v297, %v335
        %341 = vst [vmem:[%s211] sm:$0xff] %v337
        %342 = vst [vmem:[%s211 + $0x8] sm:$0xff] %v338
        %343 = vst [vmem:[%s211 + $0x10] sm:$0xff] %v339
        %344 = vst [vmem:[%s211 + $0x18] sm:$0xff] %v340
        %s345 = sand.u32 %s121, 1
        %s346 = scalar_lea.sflag [#allocation3], %s345
        %s347 = sand.u32 %s121, 1
        %s348 = smul.addr %s347, 32
        %s349 = scalar_lea.vmem [#allocation5], %s348
        // Predicated region
        $region41: #{tpu_custom_call.1} parent=35 // pred_check
          %p350 = pneg %p131
        $region42: #{tpu_custom_call.1} parent=35 // pred_check_branch
          %352 = sbr.rel (%p350) target = $region44
        $region43: #{tpu_custom_call.1} parent=35 // pred_region
          %354 = vsyncadd %s346, 0
          %s355 = smul.addr %s19, 8
          %s356 = scalar_lea.hbm %s4, %s355
          %s357 = sshll.u32 %s349, 4
          %s358 = int_to_ptr.vmem [resolvable:$true] %s357
          %s359 = sshll.u32 %s356, 4
          %s360 = int_to_ptr.hbm [resolvable:$true] %s359
          %365 = dma.vmem_to_hbm [thread:$0]  %s358, 512, %s360, %s346, 128, 256, 8
        $region44: #{tpu_custom_call.1} parent=35 // pred_fallthru
          _
      $region36: #{tpu_custom_call.1} parent=5 // pred_fallthru
        _
      %p366 = scmp.le.s32.totalorder 2, %s14
      // Predicated region
      $region45: #{tpu_custom_call.1} parent=5 // pred_check
        %p367 = pneg %p366
      $region46: #{tpu_custom_call.1} parent=5 // pred_check_branch
        %369 = sbr.rel (%p367) target = $region48
      $region47: #{tpu_custom_call.1} parent=5 // pred_region
        %s370 = ssub.s32 %s14, 2
        // Predicated region
        $region49: #{tpu_custom_call.1} parent=47 // pred_check
          %p371 = pneg %p137
        $region50: #{tpu_custom_call.1} parent=47 // pred_check_branch
          %373 = sbr.rel (%p371) target = $region52
        $region51: #{tpu_custom_call.1} parent=47 // pred_region
          %s374 = sand.u32 %s122, 1
          %s375 = scalar_lea.sflag [#allocation3], %s374
          %s376 = sand.u32 %s122, 1
          %s377 = smul.addr %s376, 32
          %s378 = scalar_lea.vmem [#allocation5], %s377
          %380 = dma.done %s375, 512
        $region52: #{tpu_custom_call.1} parent=47 // pred_fallthru
          _
      $region48: #{tpu_custom_call.1} parent=5 // pred_fallthru
        _
    $region6: #{tpu_custom_call.1} parent=1 // loop_footer
      %s18 = sadd.s32 1, %s14
    $region7: #{tpu_custom_call.1} parent=1 // loop_footer_branch
      %13 = sbr.rel target = $region3
    $region8: #{tpu_custom_call.1} parent=1 // loop_exit
      _
    %381 = vsyncpa [#allocation3], 1
    %s382 = scalar_lea.sflag [#allocation3], 1
    %383 = vsyncpa %s382, 1
    %384 = vsyncpa [#allocation4], 1
    %s385 = scalar_lea.sflag [#allocation4], 1
    %386 = vsyncpa %s385, 1

</llo_original>
